<compile_context>
chip_gen: v7x
topology: tpu7x:2x2x1
jax: 0.10.0
libtpu: 0.0.40
codegen_flags: <defaults>
</compile_context>

<pallas_src>
import functools

import jax
import jax.numpy as jnp
from jax.experimental import pallas as pl
from jax.experimental.pallas import tpu as pltpu


def _round_up(x, m):
    return (x + m - 1) // m * m


def _auto_tanh_dtype():
    # bf16 EUP/VPU exist on v6e and newer; keep f32 on v5e and older.
    kind = jax.devices()[0].device_kind.lower()
    if any(v in kind for v in ("v2", "v3", "v4", "v5")):
        return jnp.float32
    return jnp.bfloat16


def _critic_kernel(x_ref, w1_ref, b1_ref, w2_ref, b2_ref, w3_ref, b3_ref,
                   out_ref, *, tanh_dtype):
    mm = w1_ref.dtype                          # matmul operand dtype (f32 / bf16)
    x = x_ref[...].astype(mm)                  # (N_S, tb), batch on lanes

    # fc1 + tanh: MXU matmul with f32 accumulation, tanh on the EUP.
    h = jnp.dot(w1_ref[...], x, preferred_element_type=jnp.float32) + b1_ref[...]
    h = jnp.tanh(h.astype(tanh_dtype))

    # fc2 + tanh
    h = jnp.dot(w2_ref[...], h.astype(mm),
                preferred_element_type=jnp.float32) + b2_ref[...]
    h = jnp.tanh(h.astype(tanh_dtype))

    # fc3 (output width 1): VPU multiply + sublane (XLU) reduction -> lane-dense
    # (1, tb) row (avoids an N=1 MXU pass and masked single-lane stores).
    v = jnp.sum(h.astype(jnp.float32) * w3_ref[...], axis=0, keepdims=True)
    out_ref[...] = (v + b3_ref[...]).astype(out_ref.dtype)


@functools.partial(jax.jit, static_argnames=("tb", "compute_dtype", "tanh_dtype"))
def critic_forward(s, params, *, tb=None, compute_dtype=jnp.float32,
                   tanh_dtype=None):
    """Critic forward pass.

    s: (B, N_S) float32.  params in PyTorch (out, in) layout:
      w1 (64, N_S), b1 (64,), w2 (64, 64), b2 (64,), w3 (1, 64), b3 (1,).
    Returns (B, 1) float32 values.
    """
    if tanh_dtype is None:
        tanh_dtype = _auto_tanh_dtype()

    B, n_s = s.shape
    H = params["w1"].shape[0]

    # Batch tile: as large as possible (per-grid-step overhead dominates this
    # tiny per-row MLP) while keeping >= 4 grid steps for large B (v7x has 2 TCs).
    if tb is None:
        tb = B if B <= 1024 else min(8192, _round_up(pl.cdiv(B, 4), 128))
    tb = int(tb)
    if tb >= B:
        tb = B                                   # single full-extent tile
    else:
        tb = _round_up(max(tb, 128), 128)        # lane-dim blocks 128-aligned
    grid = (pl.cdiv(B, tb),)                     # ragged last tile handled by Pallas

    # Feature-major input: the only wrapper-side op on s (transpose, fused with
    # the optional bf16 cast).  Callers holding s as (N_S, B) could skip it.
    x = s.T.astype(compute_dtype)                                 # (N_S, B)

    w1 = params["w1"].astype(compute_dtype)                       # (H, N_S)
    w2 = params["w2"].astype(compute_dtype)                       # (H, H)
    b1 = params["b1"].reshape(H, 1).astype(jnp.float32)
    b2 = params["b2"].reshape(H, 1).astype(jnp.float32)
    w3 = params["w3"].reshape(H, 1).astype(jnp.float32)           # fc3 as column
    b3 = params["b3"].reshape(1, 1).astype(jnp.float32)

    const = lambda i: (0, 0)
    cost = pl.CostEstimate(
        flops=2 * B * (n_s * H + H * H + H),
        transcendentals=2 * H * B,
        bytes_accessed=B * (n_s * x.dtype.itemsize + 4)
        + (n_s * H + H * H) * w1.dtype.itemsize + (3 * H + 1) * 4,
    )

    out = pl.pallas_call(
        functools.partial(_critic_kernel, tanh_dtype=tanh_dtype),
        out_shape=jax.ShapeDtypeStruct((1, B), jnp.float32),
        grid=grid,
        in_specs=[
            pl.BlockSpec((n_s, tb), lambda i: (0, i)),   # s^T: batch-tiled on lanes
            pl.BlockSpec((H, n_s), const),               # w1 (VMEM-resident)
            pl.BlockSpec((H, 1), const),                 # b1
            pl.BlockSpec((H, H), const),                 # w2
            pl.BlockSpec((H, 1), const),                 # b2
            pl.BlockSpec((H, 1), const),                 # w3 column
            pl.BlockSpec((1, 1), const),                 # b3
        ],
        out_specs=pl.BlockSpec((1, tb), lambda i: (0, i)),   # lane-dense output row
        compiler_params=pltpu.CompilerParams(
            dimension_semantics=("parallel",),           # shard batch tiles across TCs
        ),
        cost_estimate=cost,
    )(x, w1, b1, w2, b2, w3, b3)

    # (1, B) -> (B, 1): pure layout plumbing (bitcast-able reshape).
    return out.reshape(B, 1)


def init_critic_params(key, n_s, h=64):
    """nn.Linear default init (U(+/- 1/sqrt(fan_in))) in PyTorch (out, in) layout,
    with the module's post-init fc3 scaling (weight*0.1, bias*0)."""
    ks = jax.random.split(key, 6)

    def lin(kw, kb, fan_in, fan_out):
        bound = 1.0 / (fan_in ** 0.5)
        w = jax.random.uniform(kw, (fan_out, fan_in), jnp.float32, -bound, bound)
        b = jax.random.uniform(kb, (fan_out,), jnp.float32, -bound, bound)
        return w, b

    w1, b1 = lin(ks[0], ks[1], n_s, h)
    w2, b2 = lin(ks[2], ks[3], h, h)
    w3, b3 = lin(ks[4], ks[5], h, 1)
    return {"w1": w1, "b1": b1, "w2": w2, "b2": b2,
            "w3": w3 * 0.1, "b3": b3 * 0.0}


def critic_ref(s, p):
    """Pure-JAX reference (matches the PyTorch module exactly)."""
    x = jnp.tanh(s @ p["w1"].T + p["b1"])
    x = jnp.tanh(x @ p["w2"].T + p["b2"])
    return x @ p["w3"].T + p["b3"]


if __name__ == "__main__":
    key = jax.random.PRNGKey(0)
    kp, ks1, ks2 = jax.random.split(key, 3)

    N_S = 8
    params = init_critic_params(kp, N_S)

    # Small batch: single full-extent tile, full f32 path (tight tolerance).
    s_small = jax.random.normal(ks1, (64, N_S), jnp.float32)
    v_small = jax.block_until_ready(
        critic_forward(s_small, params,
                       compute_dtype=jnp.float32, tanh_dtype=jnp.float32))
    assert v_small.shape == (64, 1)
    assert jnp.allclose(v_small, critic_ref(s_small, params), atol=5e-5, rtol=1e-4)

    # Ragged multi-tile batch: exercises the 1-D grid, double-buffered pipeline
    # and the edge-block (no-pad) path.
    s_big = jax.random.normal(ks2, (1040, N_S), jnp.float32)
    v_big = jax.block_until_ready(
        critic_forward(s_big, params, tb=384,
                       compute_dtype=jnp.float32, tanh_dtype=jnp.float32))
    assert v_big.shape == (1040, 1)
    assert jnp.allclose(v_big, critic_ref(s_big, params), atol=5e-5, rtol=1e-4)

    # Default config: auto tile size + auto tanh dtype (bf16 on v6e/v7x, f32 on
    # v5e and older); loose tolerance covers the bf16-tanh case.
    v_def = jax.block_until_ready(critic_forward(s_big, params))
    assert v_def.shape == (1040, 1)
    assert jnp.allclose(v_def, critic_ref(s_big, params), atol=5e-2, rtol=5e-2)

    # bf16 matmul-operand path (mem-bound regime); f32 accumulation keeps accuracy.
    v_bf16 = jax.block_until_ready(
        critic_forward(s_big, params, compute_dtype=jnp.bfloat16))
    assert jnp.allclose(v_bf16, critic_ref(s_big, params), atol=5e-2, rtol=5e-2)

    print("KERNEL_OK")
</pallas_src>

<mosaic_0001>
module attributes {stable_mosaic.version = 11 : i64} {
  func.func @_critic_kernel(%arg0: i32, %arg1: memref<8x64xf32, #tpu.memory_space<vmem>>, %arg2: memref<64x8xf32, #tpu.memory_space<vmem>>, %arg3: memref<64x1xf32, #tpu.memory_space<vmem>>, %arg4: memref<64x64xf32, #tpu.memory_space<vmem>>, %arg5: memref<64x1xf32, #tpu.memory_space<vmem>>, %arg6: memref<64x1xf32, #tpu.memory_space<vmem>>, %arg7: memref<1x1xf32, #tpu.memory_space<vmem>>, %arg8: memref<1x64xf32, #tpu.memory_space<vmem>>) attributes {dimension_semantics = [#tpu.dimension_semantics<parallel>], iteration_bounds = array<i64: 1>, scalar_prefetch = 0 : i64, scratch_operands = 0 : i64, tpu.core_type = #tpu.core_type<tc>, window_params = [{transform_indices = @transform_0, window_bounds = array<i64: 8, 64>}, {pipeline_mode = #tpu.pipeline_mode<synchronous>, transform_indices = @transform_1, window_bounds = array<i64: 64, 8>}, {pipeline_mode = #tpu.pipeline_mode<synchronous>, transform_indices = @transform_2, window_bounds = array<i64: 64, 1>}, {pipeline_mode = #tpu.pipeline_mode<synchronous>, transform_indices = @transform_3, window_bounds = array<i64: 64, 64>}, {pipeline_mode = #tpu.pipeline_mode<synchronous>, transform_indices = @transform_4, window_bounds = array<i64: 64, 1>}, {pipeline_mode = #tpu.pipeline_mode<synchronous>, transform_indices = @transform_5, window_bounds = array<i64: 64, 1>}, {pipeline_mode = #tpu.pipeline_mode<synchronous>, transform_indices = @transform_6, window_bounds = array<i64: 1, 1>}, {transform_indices = @transform_7, window_bounds = array<i64: 1, 64>}]} {
    %c0 = arith.constant 0 : index
    %c0_0 = arith.constant 0 : index
    %0 = vector.load %arg1[%c0, %c0_0] : memref<8x64xf32, #tpu.memory_space<vmem>>, vector<8x64xf32>
    %c0_1 = arith.constant 0 : index
    %c0_2 = arith.constant 0 : index
    %1 = vector.load %arg2[%c0_1, %c0_2] : memref<64x8xf32, #tpu.memory_space<vmem>>, vector<64x8xf32>
    %cst = arith.constant dense<0.000000e+00> : vector<64x64xf32>
    %2 = tpu.matmul %1, %0, %cst {dimension_numbers = #tpu.dot_dimension_numbers<[1], [0], [0], [1], [0, 0, 1, 1], [], []>} : vector<64x8xf32>, vector<8x64xf32>, vector<64x64xf32> -> vector<64x64xf32>
    %c0_3 = arith.constant 0 : index
    %c0_4 = arith.constant 0 : index
    %3 = vector.load %arg3[%c0_3, %c0_4] : memref<64x1xf32, #tpu.memory_space<vmem>>, vector<64x1xf32>
    %4 = vector.broadcast %3 : vector<64x1xf32> to vector<64x64xf32>
    %5 = arith.addf %2, %4 : vector<64x64xf32>
    %6 = math.tanh %5 : vector<64x64xf32>
    %c0_5 = arith.constant 0 : index
    %c0_6 = arith.constant 0 : index
    %7 = vector.load %arg4[%c0_5, %c0_6] : memref<64x64xf32, #tpu.memory_space<vmem>>, vector<64x64xf32>
    %cst_7 = arith.constant dense<0.000000e+00> : vector<64x64xf32>
    %8 = tpu.matmul %7, %6, %cst_7 {dimension_numbers = #tpu.dot_dimension_numbers<[1], [0], [0], [1], [0, 0, 1, 1], [], []>} : vector<64x64xf32>, vector<64x64xf32>, vector<64x64xf32> -> vector<64x64xf32>
    %c0_8 = arith.constant 0 : index
    %c0_9 = arith.constant 0 : index
    %9 = vector.load %arg5[%c0_8, %c0_9] : memref<64x1xf32, #tpu.memory_space<vmem>>, vector<64x1xf32>
    %10 = vector.broadcast %9 : vector<64x1xf32> to vector<64x64xf32>
    %11 = arith.addf %8, %10 : vector<64x64xf32>
    %12 = math.tanh %11 : vector<64x64xf32>
    %c0_10 = arith.constant 0 : index
    %c0_11 = arith.constant 0 : index
    %13 = vector.load %arg6[%c0_10, %c0_11] : memref<64x1xf32, #tpu.memory_space<vmem>>, vector<64x1xf32>
    %14 = vector.broadcast %13 : vector<64x1xf32> to vector<64x64xf32>
    %15 = arith.mulf %12, %14 : vector<64x64xf32>
    %cst_12 = arith.constant dense<0.000000e+00> : vector<64xf32>
    %16 = vector.multi_reduction <add>, %15, %cst_12 [0] : vector<64x64xf32> to vector<64xf32>
    %17 = vector.shape_cast %16 : vector<64xf32> to vector<1x64xf32>
    %c0_13 = arith.constant 0 : index
    %c0_14 = arith.constant 0 : index
    %18 = vector.load %arg7[%c0_13, %c0_14] : memref<1x1xf32, #tpu.memory_space<vmem>>, vector<1x1xf32>
    %19 = vector.broadcast %18 : vector<1x1xf32> to vector<1x64xf32>
    %20 = arith.addf %17, %19 : vector<1x64xf32>
    %c0_15 = arith.constant 0 : index
    %c0_16 = arith.constant 0 : index
    %21 = vector.load %arg8[%c0_15, %c0_16] : memref<1x64xf32, #tpu.memory_space<vmem>>, vector<1x64xf32>
    tpu.vector_store %arg8[%c0_15, %c0_16], %20 {strides = array<i32>} : memref<1x64xf32, #tpu.memory_space<vmem>>, vector<1x64xf32>,
    return
  }
  func.func @transform_0(%arg0: i32) -> (i32, i32) {
    %c0_i32 = arith.constant 0 : i32
    %c0_i32_0 = arith.constant 0 : i32
    return %c0_i32, %arg0 : i32, i32
  }
  func.func @transform_1(%arg0: i32) -> (i32, i32) {
    %c0_i32 = arith.constant 0 : i32
    %c0_i32_0 = arith.constant 0 : i32
    %c0_i32_1 = arith.constant 0 : i32
    return %c0_i32, %c0_i32_0 : i32, i32
  }
  func.func @transform_2(%arg0: i32) -> (i32, i32) {
    %c0_i32 = arith.constant 0 : i32
    %c0_i32_0 = arith.constant 0 : i32
    %c0_i32_1 = arith.constant 0 : i32
    return %c0_i32, %c0_i32_0 : i32, i32
  }
  func.func @transform_3(%arg0: i32) -> (i32, i32) {
    %c0_i32 = arith.constant 0 : i32
    %c0_i32_0 = arith.constant 0 : i32
    %c0_i32_1 = arith.constant 0 : i32
    return %c0_i32, %c0_i32_0 : i32, i32
  }
  func.func @transform_4(%arg0: i32) -> (i32, i32) {
    %c0_i32 = arith.constant 0 : i32
    %c0_i32_0 = arith.constant 0 : i32
    %c0_i32_1 = arith.constant 0 : i32
    return %c0_i32, %c0_i32_0 : i32, i32
  }
  func.func @transform_5(%arg0: i32) -> (i32, i32) {
    %c0_i32 = arith.constant 0 : i32
    %c0_i32_0 = arith.constant 0 : i32
    %c0_i32_1 = arith.constant 0 : i32
    return %c0_i32, %c0_i32_0 : i32, i32
  }
  func.func @transform_6(%arg0: i32) -> (i32, i32) {
    %c0_i32 = arith.constant 0 : i32
    %c0_i32_0 = arith.constant 0 : i32
    %c0_i32_1 = arith.constant 0 : i32
    return %c0_i32, %c0_i32_0 : i32, i32
  }
  func.func @transform_7(%arg0: i32) -> (i32, i32) {
    %c0_i32 = arith.constant 0 : i32
    %c0_i32_0 = arith.constant 0 : i32
    return %c0_i32, %arg0 : i32, i32
  }
}

</mosaic_0001>

<llo_original>
// kernel: critic_forward.1
$region0: #{critic_forward.1}
  #allocation0 [shape = 'u32[]', space=smem, size = 0x4, offset = 0x4, fixed_abs, tag = 'smem constant byte address 0x4 - core index']
  #allocation1 [shape = 'u32[144,128]{1,0:T(1,128)}', space=vmem, size = 0x12000, scoped, tag = 'internal scratch']
  #allocation2 [shape = 'f32[1,1]{1,0:T(1,128)S(1)}', space=vmem, size = 0x200, scoped, tag = 'scoped memory for critic_forward.1']
  %s0 = inlined_call_operand.vmem [shape: f32[8,64], index: 0, kind: input, shape index: {}]
  %s1 = inlined_call_operand.vmem [shape: f32[64,8], index: 1, kind: input, shape index: {}]
  %s2 = inlined_call_operand.vmem [shape: f32[64,1], index: 2, kind: input, shape index: {}]
  %s3 = inlined_call_operand.vmem [shape: f32[64,64], index: 3, kind: input, shape index: {}]
  %s4 = inlined_call_operand.vmem [shape: f32[64,1], index: 4, kind: input, shape index: {}]
  %s5 = inlined_call_operand.vmem [shape: f32[64,1], index: 5, kind: input, shape index: {}]
  %s6 = inlined_call_operand.<no memory space> [shape: f32[1,1], index: 6, kind: input, shape index: {}]
  %s7 = inlined_call_operand.hbm [shape: f32[1,64], index: 7, kind: output, shape index: {}]
  %s8 = sld [smem:[#allocation0]]
  $region38: #{critic_forward.1} parent=0
    _
  %s10 = ssub.s32 1, %s8
  %s11 = scalar_select 0, %s10, %s8
  %v12 = vstv %s6
  %13 = vst [vmem:[#allocation2] sm:$0x1] %v12
  $region1: #{critic_forward.1} parent=0
    #allocation3 [shape = 'u8[512]{0}', space=vmem, size = 0x400, scoped, tag = 'output window, operand 0, single buffered']
    #allocation4 [shape = 's32[1]{0}', space=sflag, size = 0x4, scoped, tag = 'scoped memory for critic_forward.1']
    %14 = vsyncpa [#allocation4], 0
    // Predicated region
    $region2: #{critic_forward.1} parent=1 // pred_check
      _
    $region3: #{critic_forward.1} parent=1 // pred_check_branch
      %16 = sbr.rel (0) target = $region5
    $region4: #{critic_forward.1} parent=1 // pred_region
      _
    $region5: #{critic_forward.1} parent=1 // pred_fallthru
      _
    // Predicated region
    $region6: #{critic_forward.1} parent=1 // pred_check
      _
    $region7: #{critic_forward.1} parent=1 // pred_check_branch
      %18 = sbr.rel (0) target = $region9
    $region8: #{critic_forward.1} parent=1 // pred_region
      _
    $region9: #{critic_forward.1} parent=1 // pred_fallthru
      _
    // Predicated region
    $region10: #{critic_forward.1} parent=1 // pred_check
      _
    $region11: #{critic_forward.1} parent=1 // pred_check_branch
      %20 = sbr.rel (0) target = $region13
    $region12: #{critic_forward.1} parent=1 // pred_region
      _
    $region13: #{critic_forward.1} parent=1 // pred_fallthru
      _
    // Predicated region
    $region14: #{critic_forward.1} parent=1 // pred_check
      _
    $region15: #{critic_forward.1} parent=1 // pred_check_branch
      %22 = sbr.rel (0) target = $region17
    $region16: #{critic_forward.1} parent=1 // pred_region
      _
    $region17: #{critic_forward.1} parent=1 // pred_fallthru
      _
    // Predicated region
    $region18: #{critic_forward.1} parent=1 // pred_check
      _
    $region19: #{critic_forward.1} parent=1 // pred_check_branch
      %24 = sbr.rel (0) target = $region21
    $region20: #{critic_forward.1} parent=1 // pred_region
      _
    $region21: #{critic_forward.1} parent=1 // pred_fallthru
      _
    // Predicated region
    $region22: #{critic_forward.1} parent=1 // pred_check
      _
    $region23: #{critic_forward.1} parent=1 // pred_check_branch
      %26 = sbr.rel (0) target = $region25
    $region24: #{critic_forward.1} parent=1 // pred_region
      _
    $region25: #{critic_forward.1} parent=1 // pred_fallthru
      _
    // Predicated region
    $region26: #{critic_forward.1} parent=1 // pred_check
      _
    $region27: #{critic_forward.1} parent=1 // pred_check_branch
      %28 = sbr.rel (0) target = $region29
    $region28: #{critic_forward.1} parent=1 // pred_region
      _
    $region29: #{critic_forward.1} parent=1 // pred_fallthru
      _
    %v29 = vld [vmem:[%s0] sm:$0xff]
    %v30 = vld [vmem:[%s1] sm:$0xff]
    %v31 = vld [vmem:[%s1 + $0x8] sm:$0xff]
    %v32 = vld [vmem:[%s1 + $0x10] sm:$0xff]
    %v33 = vld [vmem:[%s1 + $0x18] sm:$0xff]
    %v34 = vld [vmem:[%s1 + $0x20] sm:$0xff]
    %v35 = vld [vmem:[%s1 + $0x28] sm:$0xff]
    %v36 = vld [vmem:[%s1 + $0x30] sm:$0xff]
    %v37 = vld [vmem:[%s1 + $0x38] sm:$0xff]
    %v38 = vld [vmem:[%s2] sm:$0xff]
    %v39 = vld [vmem:[%s2 + $0x8] sm:$0xff]
    %v40 = vld [vmem:[%s2 + $0x10] sm:$0xff]
    %v41 = vld [vmem:[%s2 + $0x18] sm:$0xff]
    %v42 = vld [vmem:[%s2 + $0x20] sm:$0xff]
    %v43 = vld [vmem:[%s2 + $0x28] sm:$0xff]
    %v44 = vld [vmem:[%s2 + $0x30] sm:$0xff]
    %v45 = vld [vmem:[%s2 + $0x38] sm:$0xff]
    %47 = vset.pattern.permute.xlu0 0
    %48 = vperm.xlu0 %47, %v38
    %v49 = vpop.permute.xlu0 %48
    %52 = vset.pattern.permute.xlu0 0
    %53 = vperm.xlu0 %52, %v39
    %v54 = vpop.permute.xlu0 %53
    %57 = vset.pattern.permute.xlu0 0
    %58 = vperm.xlu0 %57, %v40
    %v59 = vpop.permute.xlu0 %58
    %62 = vset.pattern.permute.xlu0 0
    %63 = vperm.xlu0 %62, %v41
    %v64 = vpop.permute.xlu0 %63
    %67 = vset.pattern.permute.xlu0 0
    %68 = vperm.xlu0 %67, %v42
    %v69 = vpop.permute.xlu0 %68
    %72 = vset.pattern.permute.xlu0 0
    %73 = vperm.xlu0 %72, %v43
    %v74 = vpop.permute.xlu0 %73
    %77 = vset.pattern.permute.xlu0 0
    %78 = vperm.xlu0 %77, %v44
    %v79 = vpop.permute.xlu0 %78
    %82 = vset.pattern.permute.xlu0 0
    %83 = vperm.xlu0 %82, %v45
    %v84 = vpop.permute.xlu0 %83
    %vm86 = vcmask 64512
    %v88 = vsel %vm86, %v30, 0
    %v91 = vsel %vm86, %v31, 0
    %v94 = vsel %vm86, %v32, 0
    %v97 = vsel %vm86, %v33, 0
    %v100 = vsel %vm86, %v34, 0
    %v103 = vsel %vm86, %v35, 0
    %v106 = vsel %vm86, %v36, 0
    %v109 = vsel %vm86, %v37, 0
    %111 = vmatprep.subr.mxu0 0.0
    %112 = vmatpush1.msra.mxu0 %v29
    %113 = vmatprep.subr.mxu0 0.0
    %114 = vmatpush1.msra.mxu0 0.0
    %115 = vmatprep.subr.mxu0 0.0
    %116 = vmatpush1.msra.mxu0 0.0
    %117 = vmatprep.subr.mxu0 0.0
    %118 = vmatpush1.msra.mxu0 0.0
    %119 = vmatprep.subr.mxu0 0.0
    %120 = vmatpush1.msra.mxu0 0.0
    %121 = vmatprep.subr.mxu0 0.0
    %122 = vmatpush1.msra.mxu0 0.0
    %123 = vmatprep.subr.mxu0 0.0
    %124 = vmatpush1.msra.mxu0 0.0
    %125 = vmatprep.subr.mxu0 0.0
    %126 = vmatpush1.msra.mxu0 0.0
    %127 = vmatprep.subr.mxu0 0.0
    %128 = vmatpush1.msra.mxu0 0.0
    %129 = vmatprep.subr.mxu0 0.0
    %130 = vmatpush1.msra.mxu0 0.0
    %131 = vmatprep.subr.mxu0 0.0
    %132 = vmatpush1.msra.mxu0 0.0
    %133 = vmatprep.subr.mxu0 0.0
    %134 = vmatpush1.msra.mxu0 0.0
    %135 = vmatprep.subr.mxu0 0.0
    %136 = vmatpush1.msra.mxu0 0.0
    %137 = vmatprep.subr.mxu0 0.0
    %138 = vmatpush1.msra.mxu0 0.0
    %139 = vmatprep.subr.mxu0 0.0
    %140 = vmatpush1.msra.mxu0 0.0
    %141 = vmatprep.subr.mxu0 0.0
    %142 = vmatpush1.msra.mxu0 0.0
    %143 = vmatprep.subr.mxu0 0.0
    %144 = vmatpush1.msra.mxu0 0.0
    %145 = vmatprep.subr.mxu0 0.0
    %146 = vmatpush1.msra.mxu0 0.0
    %147 = vmatprep.subr.mxu0 0.0
    %148 = vmatpush1.msra.mxu0 0.0
    %149 = vmatprep.subr.mxu0 0.0
    %150 = vmatpush1.msra.mxu0 0.0
    %151 = vmatprep.subr.mxu0 0.0
    %152 = vmatpush1.msra.mxu0 0.0
    %153 = vmatprep.subr.mxu0 0.0
    %154 = vmatpush1.msra.mxu0 0.0
    %155 = vmatprep.subr.mxu0 0.0
    %156 = vmatpush1.msra.mxu0 0.0
    %157 = vmatprep.subr.mxu0 0.0
    %158 = vmatpush1.msra.mxu0 0.0
    %159 = vmatprep.subr.mxu0 0.0
    %160 = vmatpush1.msra.mxu0 0.0
    %161 = vmatprep.subr.mxu0 0.0
    %162 = vmatpush1.msra.mxu0 0.0
    %163 = vmatprep.subr.mxu0 0.0
    %164 = vmatpush1.msra.mxu0 0.0
    %165 = vmatprep.subr.mxu0 0.0
    %166 = vmatpush1.msra.mxu0 0.0
    %167 = vmatprep.subr.mxu0 0.0
    %168 = vmatpush1.msra.mxu0 0.0
    %169 = vmatprep.subr.mxu0 0.0
    %170 = vmatpush1.msra.mxu0 0.0
    %171 = vmatprep.subr.mxu0 0.0
    %172 = vmatpush1.msra.mxu0 0.0
    %173 = vmatprep.subr.mxu0 0.0
    %174 = vmatpush1.msra.mxu0 0.0
    %175 = vmatprep.mubr.f32.mxu0 0.0
    %176 = vmatmul.mubr.f32.gmra.mrb[0].mxu0 %v88
    %v177 = vpop.f32.mrb[0].mxu0
    %v178 = vadd.f32 %v49, %v177
    %v179 = vpop.f32.mrb[0].mxu0
    %180 = vmatprep.mubr.f32.mxu0 0.0
    %181 = vmatmul.mubr.f32.gmra.mrb[0].mxu0 %v91
    %v182 = vpop.f32.mrb[0].mxu0
    %v183 = vadd.f32 %v54, %v182
    %v184 = vpop.f32.mrb[0].mxu0
    %185 = vmatprep.mubr.f32.mxu0 0.0
    %186 = vmatmul.mubr.f32.gmra.mrb[0].mxu0 %v94
    %v187 = vpop.f32.mrb[0].mxu0
    %v188 = vadd.f32 %v59, %v187
    %v189 = vpop.f32.mrb[0].mxu0
    %190 = vmatprep.mubr.f32.mxu0 0.0
    %191 = vmatmul.mubr.f32.gmra.mrb[0].mxu0 %v97
    %v192 = vpop.f32.mrb[0].mxu0
    %v193 = vadd.f32 %v64, %v192
    %v194 = vpop.f32.mrb[0].mxu0
    %195 = vmatprep.mubr.f32.mxu0 0.0
    %196 = vmatmul.mubr.f32.gmra.mrb[0].mxu0 %v100
    %v197 = vpop.f32.mrb[0].mxu0
    %v198 = vadd.f32 %v69, %v197
    %v199 = vpop.f32.mrb[0].mxu0
    %200 = vmatprep.mubr.f32.mxu0 0.0
    %201 = vmatmul.mubr.f32.gmra.mrb[0].mxu0 %v103
    %v202 = vpop.f32.mrb[0].mxu0
    %v203 = vadd.f32 %v74, %v202
    %v204 = vpop.f32.mrb[0].mxu0
    %205 = vmatprep.mubr.f32.mxu0 0.0
    %206 = vmatmul.mubr.f32.gmra.mrb[0].mxu0 %v106
    %v207 = vpop.f32.mrb[0].mxu0
    %v208 = vadd.f32 %v79, %v207
    %v209 = vpop.f32.mrb[0].mxu0
    %210 = vmatprep.mubr.f32.mxu0 0.0
    %211 = vmatmul.mubr.f32.gmra.mrb[0].mxu0 %v109
    %v212 = vpop.f32.mrb[0].mxu0
    %v213 = vadd.f32 %v84, %v212
    %v214 = vpop.f32.mrb[0].mxu0
    %215 = vdwg.mxu0
    %v216 = vtanh.pop %v178
    %v217 = vtanh.pop %v183
    %v218 = vtanh.pop %v188
    %v219 = vtanh.pop %v193
    %v220 = vtanh.pop %v198
    %v221 = vtanh.pop %v203
    %v222 = vtanh.pop %v208
    %v223 = vtanh.pop %v213
    %v224 = vld [vmem:[%s3] sm:$0xff]
    %v225 = vld [vmem:[%s3 + $0x8] sm:$0xff]
    %v226 = vld [vmem:[%s3 + $0x10] sm:$0xff]
    %v227 = vld [vmem:[%s3 + $0x18] sm:$0xff]
    %v228 = vld [vmem:[%s3 + $0x20] sm:$0xff]
    %v229 = vld [vmem:[%s3 + $0x28] sm:$0xff]
    %v230 = vld [vmem:[%s3 + $0x30] sm:$0xff]
    %v231 = vld [vmem:[%s3 + $0x38] sm:$0xff]
    %v232 = vld [vmem:[%s4] sm:$0xff]
    %v233 = vld [vmem:[%s4 + $0x8] sm:$0xff]
    %v234 = vld [vmem:[%s4 + $0x10] sm:$0xff]
    %v235 = vld [vmem:[%s4 + $0x18] sm:$0xff]
    %v236 = vld [vmem:[%s4 + $0x20] sm:$0xff]
    %v237 = vld [vmem:[%s4 + $0x28] sm:$0xff]
    %v238 = vld [vmem:[%s4 + $0x30] sm:$0xff]
    %v239 = vld [vmem:[%s4 + $0x38] sm:$0xff]
    %241 = vset.pattern.permute.xlu0 0
    %242 = vperm.xlu0 %241, %v232
    %v243 = vpop.permute.xlu0 %242
    %246 = vset.pattern.permute.xlu0 0
    %247 = vperm.xlu0 %246, %v233
    %v248 = vpop.permute.xlu0 %247
    %251 = vset.pattern.permute.xlu0 0
    %252 = vperm.xlu0 %251, %v234
    %v253 = vpop.permute.xlu0 %252
    %256 = vset.pattern.permute.xlu0 0
    %257 = vperm.xlu0 %256, %v235
    %v258 = vpop.permute.xlu0 %257
    %261 = vset.pattern.permute.xlu0 0
    %262 = vperm.xlu0 %261, %v236
    %v263 = vpop.permute.xlu0 %262
    %266 = vset.pattern.permute.xlu0 0
    %267 = vperm.xlu0 %266, %v237
    %v268 = vpop.permute.xlu0 %267
    %271 = vset.pattern.permute.xlu0 0
    %272 = vperm.xlu0 %271, %v238
    %v273 = vpop.permute.xlu0 %272
    %276 = vset.pattern.permute.xlu0 0
    %277 = vperm.xlu0 %276, %v239
    %v278 = vpop.permute.xlu0 %277
    %vm280 = vcmask 523264
    %v282 = vsel %vm280, %v224, 0
    %v285 = vsel %vm280, %v225, 0
    %v288 = vsel %vm280, %v226, 0
    %v291 = vsel %vm280, %v227, 0
    %v294 = vsel %vm280, %v228, 0
    %v297 = vsel %vm280, %v229, 0
    %v300 = vsel %vm280, %v230, 0
    %v303 = vsel %vm280, %v231, 0
    %305 = vmatprep.subr.mxu0 0.0
    %306 = vmatpush1.msra.mxu0 %v216
    %307 = vmatprep.subr.mxu0 0.0
    %308 = vmatpush1.msra.mxu0 %v217
    %309 = vmatprep.subr.mxu0 0.0
    %310 = vmatpush1.msra.mxu0 %v218
    %311 = vmatprep.subr.mxu0 0.0
    %312 = vmatpush1.msra.mxu0 %v219
    %313 = vmatprep.subr.mxu0 0.0
    %314 = vmatpush1.msra.mxu0 %v220
    %315 = vmatprep.subr.mxu0 0.0
    %316 = vmatpush1.msra.mxu0 %v221
    %317 = vmatprep.subr.mxu0 0.0
    %318 = vmatpush1.msra.mxu0 %v222
    %319 = vmatprep.subr.mxu0 0.0
    %320 = vmatpush1.msra.mxu0 %v223
    %321 = vmatprep.subr.mxu0 0.0
    %322 = vmatpush1.msra.mxu0 0.0
    %323 = vmatprep.subr.mxu0 0.0
    %324 = vmatpush1.msra.mxu0 0.0
    %325 = vmatprep.subr.mxu0 0.0
    %326 = vmatpush1.msra.mxu0 0.0
    %327 = vmatprep.subr.mxu0 0.0
    %328 = vmatpush1.msra.mxu0 0.0
    %329 = vmatprep.subr.mxu0 0.0
    %330 = vmatpush1.msra.mxu0 0.0
    %331 = vmatprep.subr.mxu0 0.0
    %332 = vmatpush1.msra.mxu0 0.0
    %333 = vmatprep.subr.mxu0 0.0
    %334 = vmatpush1.msra.mxu0 0.0
    %335 = vmatprep.subr.mxu0 0.0
    %336 = vmatpush1.msra.mxu0 0.0
    %337 = vmatprep.subr.mxu0 0.0
    %338 = vmatpush1.msra.mxu0 0.0
    %339 = vmatprep.subr.mxu0 0.0
    %340 = vmatpush1.msra.mxu0 0.0
    %341 = vmatprep.subr.mxu0 0.0
    %342 = vmatpush1.msra.mxu0 0.0
    %343 = vmatprep.subr.mxu0 0.0
    %344 = vmatpush1.msra.mxu0 0.0
    %345 = vmatprep.subr.mxu0 0.0
    %346 = vmatpush1.msra.mxu0 0.0
    %347 = vmatprep.subr.mxu0 0.0
    %348 = vmatpush1.msra.mxu0 0.0
    %349 = vmatprep.subr.mxu0 0.0
    %350 = vmatpush1.msra.mxu0 0.0
    %351 = vmatprep.subr.mxu0 0.0
    %352 = vmatpush1.msra.mxu0 0.0
    %353 = vmatprep.subr.mxu0 0.0
    %354 = vmatpush1.msra.mxu0 0.0
    %355 = vmatprep.subr.mxu0 0.0
    %356 = vmatpush1.msra.mxu0 0.0
    %357 = vmatprep.subr.mxu0 0.0
    %358 = vmatpush1.msra.mxu0 0.0
    %359 = vmatprep.subr.mxu0 0.0
    %360 = vmatpush1.msra.mxu0 0.0
    %361 = vmatprep.subr.mxu0 0.0
    %362 = vmatpush1.msra.mxu0 0.0
    %363 = vmatprep.subr.mxu0 0.0
    %364 = vmatpush1.msra.mxu0 0.0
    %365 = vmatprep.subr.mxu0 0.0
    %366 = vmatpush1.msra.mxu0 0.0
    %367 = vmatprep.subr.mxu0 0.0
    %368 = vmatpush1.msra.mxu0 0.0
    %369 = vmatprep.mubr.f32.mxu0 0.0
    %370 = vmatmul.mubr.f32.gmra.mrb[0].mxu0 %v282
    %v371 = vpop.f32.mrb[0].mxu0
    %v372 = vadd.f32 %v243, %v371
    %v373 = vpop.f32.mrb[0].mxu0
    %374 = vmatprep.mubr.f32.mxu0 0.0
    %375 = vmatmul.mubr.f32.gmra.mrb[0].mxu0 %v285
    %v376 = vpop.f32.mrb[0].mxu0
    %v377 = vadd.f32 %v248, %v376
    %v378 = vpop.f32.mrb[0].mxu0
    %379 = vmatprep.mubr.f32.mxu0 0.0
    %380 = vmatmul.mubr.f32.gmra.mrb[0].mxu0 %v288
    %v381 = vpop.f32.mrb[0].mxu0
    %v382 = vadd.f32 %v253, %v381
    %v383 = vpop.f32.mrb[0].mxu0
    %384 = vmatprep.mubr.f32.mxu0 0.0
    %385 = vmatmul.mubr.f32.gmra.mrb[0].mxu0 %v291
    %v386 = vpop.f32.mrb[0].mxu0
    %v387 = vadd.f32 %v258, %v386
    %v388 = vpop.f32.mrb[0].mxu0
    %389 = vmatprep.mubr.f32.mxu0 0.0
    %390 = vmatmul.mubr.f32.gmra.mrb[0].mxu0 %v294
    %v391 = vpop.f32.mrb[0].mxu0
    %v392 = vadd.f32 %v263, %v391
    %v393 = vpop.f32.mrb[0].mxu0
    %394 = vmatprep.mubr.f32.mxu0 0.0
    %395 = vmatmul.mubr.f32.gmra.mrb[0].mxu0 %v297
    %v396 = vpop.f32.mrb[0].mxu0
    %v397 = vadd.f32 %v268, %v396
    %v398 = vpop.f32.mrb[0].mxu0
    %399 = vmatprep.mubr.f32.mxu0 0.0
    %400 = vmatmul.mubr.f32.gmra.mrb[0].mxu0 %v300
    %v401 = vpop.f32.mrb[0].mxu0
    %v402 = vadd.f32 %v273, %v401
    %v403 = vpop.f32.mrb[0].mxu0
    %404 = vmatprep.mubr.f32.mxu0 0.0
    %405 = vmatmul.mubr.f32.gmra.mrb[0].mxu0 %v303
    %v406 = vpop.f32.mrb[0].mxu0
    %v407 = vadd.f32 %v278, %v406
    %v408 = vpop.f32.mrb[0].mxu0
    %409 = vdwg.mxu0
    %v410 = vtanh.pop %v372
    %v411 = vtanh.pop %v377
    %v412 = vtanh.pop %v382
    %v413 = vtanh.pop %v387
    %v414 = vtanh.pop %v392
    %v415 = vtanh.pop %v397
    %v416 = vtanh.pop %v402
    %v417 = vtanh.pop %v407
    %v418 = vld [vmem:[%s5] sm:$0xff]
    %v419 = vld [vmem:[%s5 + $0x8] sm:$0xff]
    %v420 = vld [vmem:[%s5 + $0x10] sm:$0xff]
    %v421 = vld [vmem:[%s5 + $0x18] sm:$0xff]
    %v422 = vld [vmem:[%s5 + $0x20] sm:$0xff]
    %v423 = vld [vmem:[%s5 + $0x28] sm:$0xff]
    %v424 = vld [vmem:[%s5 + $0x30] sm:$0xff]
    %v425 = vld [vmem:[%s5 + $0x38] sm:$0xff]
    %427 = vset.pattern.permute.xlu0 0
    %428 = vperm.xlu0 %427, %v418
    %v429 = vpop.permute.xlu0 %428
    %432 = vset.pattern.permute.xlu0 0
    %433 = vperm.xlu0 %432, %v419
    %v434 = vpop.permute.xlu0 %433
    %437 = vset.pattern.permute.xlu0 0
    %438 = vperm.xlu0 %437, %v420
    %v439 = vpop.permute.xlu0 %438
    %442 = vset.pattern.permute.xlu0 0
    %443 = vperm.xlu0 %442, %v421
    %v444 = vpop.permute.xlu0 %443
    %447 = vset.pattern.permute.xlu0 0
    %448 = vperm.xlu0 %447, %v422
    %v449 = vpop.permute.xlu0 %448
    %452 = vset.pattern.permute.xlu0 0
    %453 = vperm.xlu0 %452, %v423
    %v454 = vpop.permute.xlu0 %453
    %457 = vset.pattern.permute.xlu0 0
    %458 = vperm.xlu0 %457, %v424
    %v459 = vpop.permute.xlu0 %458
    %462 = vset.pattern.permute.xlu0 0
    %463 = vperm.xlu0 %462, %v425
    %v464 = vpop.permute.xlu0 %463
    %v466 = vmul.f32 %v410, %v429
    %v467 = vmul.f32 %v411, %v434
    %v468 = vmul.f32 %v412, %v439
    %v469 = vmul.f32 %v413, %v444
    %v470 = vmul.f32 %v414, %v449
    %v471 = vmul.f32 %v415, %v454
    %v472 = vmul.f32 %v416, %v459
    %v473 = vmul.f32 %v417, %v464
    %v474 = vsel %vm280, %v466, 0.0
    %v475 = vsel %vm280, %v467, 0.0
    %v476 = vadd.f32 %v474, %v475
    %v477 = vsel %vm280, %v468, 0.0
    %v478 = vadd.f32 %v476, %v477
    %v479 = vsel %vm280, %v469, 0.0
    %v480 = vadd.f32 %v478, %v479
    %v481 = vsel %vm280, %v470, 0.0
    %v482 = vadd.f32 %v480, %v481
    %v483 = vsel %vm280, %v471, 0.0
    %v484 = vadd.f32 %v482, %v483
    %v485 = vsel %vm280, %v472, 0.0
    %v486 = vadd.f32 %v484, %v485
    %v487 = vsel %vm280, %v473, 0.0
    %v488 = vadd.f32 %v486, %v487
    %v489 = vrot.slane %v488, 4
    %v490 = vadd.f32 %v488, %v489
    %v491 = vrot.slane %v490, 2
    %v492 = vadd.f32 %v490, %v491
    %v493 = vrot.slane %v492, 1
    %v494 = vadd.f32 %v492, %v493
    %v495 = vld [vmem:[#allocation2] sm:$0x1]
    %497 = vset.pattern.permute.xlu0 0
    %498 = vperm.xlu0 %497, %v495
    %v499 = vpop.permute.xlu0 %498
    %v501 = vlaneseq
    %v502 = vshrl.u32 %v501, 7
    %v503 = vsub.s32 0, %v502
    %v504 = vrot.slane %v499, %v503
    %v505 = vadd.f32 %v494, %v504
    %vm506 = vcmask 516096
    %507 = vst.msk [vmem:[#allocation3] sm:$0x1] %vm506, %v505
    // Predicated region
    $region30: #{critic_forward.1} parent=1 // pred_check
      _
    $region31: #{critic_forward.1} parent=1 // pred_check_branch
      %509 = sbr.rel (0) target = $region33
    $region32: #{critic_forward.1} parent=1 // pred_region
      %s511 = ssub.s32 16, 16
      %512 = vsyncadd [#allocation4], %s511
      %s514 = sshll.u32 [#allocation3], 4
      %s515 = int_to_ptr.vmem [resolvable:$true] %s514
      %517 = dma.vmem_to_hbm [thread:$0]  %s515, 16, %s7, [#allocation4]
    $region33: #{critic_forward.1} parent=1 // pred_fallthru
      _
    // Predicated region
    $region34: #{critic_forward.1} parent=1 // pred_check
      _
    $region35: #{critic_forward.1} parent=1 // pred_check_branch
      %519 = sbr.rel (0) target = $region37
    $region36: #{critic_forward.1} parent=1 // pred_region
      %520 = dma.done [#allocation4], 16
    $region37: #{critic_forward.1} parent=1 // pred_fallthru
      _
    %521 = vsyncpa [#allocation4], 1

</llo_original>
